<compile_context>
chip_gen: v5e
topology: v5e:2x2
jax: 0.10.0
libtpu: 0.0.40
codegen_flags: <defaults>
</compile_context>

<pallas_src>
import functools

import jax
import jax.numpy as jnp
from jax import lax
from jax.experimental import pallas as pl
from jax.experimental.pallas import tpu as pltpu


# dot_general dimension numbers for 2-D operands:
#   _NT: contract the last dim of both operands  -> A @ B^T
#        (used for x @ W^T with (out,in)-layout weights, and q @ k^T row scores)
#   _TN: contract the first dim of both operands -> A^T @ B (q^T @ k column scores)
_NT = (((1,), (1,)), ((), ()))
_TN = (((0,), (0,)), ((), ()))


def _axial_attn_kernel(x_ref, wq_ref, wk_ref, wv_ref, bq_ref, bk_ref, bv_ref,
                       o_ref):
    f32 = jnp.float32
    x = x_ref[0]                       # (N, E) bf16
    mxu_dtype = x.dtype

    # qkv projection: y = x @ W^T + b.  1/scale already folded into wq/bq.
    q = lax.dot_general(x, wq_ref[...], _NT, preferred_element_type=f32) + bq_ref[...]
    k = lax.dot_general(x, wk_ref[...], _NT, preferred_element_type=f32) + bk_ref[...]
    v = lax.dot_general(x, wv_ref[...], _NT, preferred_element_type=f32) + bv_ref[...]

    qb = q.astype(mxu_dtype)
    kb = k.astype(mxu_dtype)
    vb = v.astype(mxu_dtype)

    # ---- row attention: softmax(q @ k^T) @ v -> (N, E) ----
    s_row = lax.dot_general(qb, kb, _NT, preferred_element_type=f32)       # (N, N)
    s_row = s_row - jnp.max(s_row, axis=-1, keepdims=True)
    p_row = jnp.exp(s_row)
    inv_row = pl.reciprocal(jnp.sum(p_row, axis=-1, keepdims=True), approx=True)
    a_row = (p_row * inv_row).astype(mxu_dtype)
    out_row = jnp.dot(a_row, vb, preferred_element_type=f32)               # (N, E)

    # ---- column attention: softmax(q^T @ k) applied to v^T ----
    s_col = lax.dot_general(qb, kb, _TN, preferred_element_type=f32)       # (E, E)
    s_col = s_col - jnp.max(s_col, axis=-1, keepdims=True)
    p_col = jnp.exp(s_col)
    inv_col = pl.reciprocal(jnp.sum(p_col, axis=-1, keepdims=True), approx=True)
    a_col = (p_col * inv_col).astype(mxu_dtype)
    # out_col = a_col @ v^T (E, N); we need out_col^T = v @ a_col^T -> (N, E)
    out_col_t = lax.dot_general(vb, a_col, _NT, preferred_element_type=f32)

    o_ref[0] = (out_row + out_col_t).astype(o_ref.dtype)


def prepare_params(w_qkv, b_qkv, embed_dim, compute_dtype=jnp.bfloat16):
    """One-time parameter prep (outside the hot path).

    Splits the fused PyTorch (3E, E) weight into per-projection (E, E) weights
    (kept in (out, in) layout — no transpose), folds 1/scale into the q
    projection, and casts MXU operands to bf16.  Biases stay f32 (added to the
    f32 accumulator)."""
    E = embed_dim
    scale = float(E) ** 0.5
    w_q, w_k, w_v = w_qkv[:E], w_qkv[E:2 * E], w_qkv[2 * E:]
    b_q, b_k, b_v = b_qkv[:E], b_qkv[E:2 * E], b_qkv[2 * E:]
    w_q = w_q / scale
    b_q = b_q / scale
    return dict(
        w_q=w_q.astype(compute_dtype),
        w_k=w_k.astype(compute_dtype),
        w_v=w_v.astype(compute_dtype),
        b_q=b_q.reshape(1, E).astype(jnp.float32),
        b_k=b_k.reshape(1, E).astype(jnp.float32),
        b_v=b_v.reshape(1, E).astype(jnp.float32),
    )


def axial_self_attention(x_bchw, params, embed_dim,
                         compute_dtype=jnp.bfloat16,
                         vmem_limit_bytes=64 * 1024 * 1024):
    """x_bchw: (B, C, H, W); params from prepare_params."""
    B, C, H, W = x_bchw.shape
    E = embed_dim
    assert (C * H * W) % E == 0
    N = (C * H * W) // E
    x = x_bchw.reshape(B, N, E).astype(compute_dtype)

    # Rough resident-VMEM estimate for one grid step (double-buffered I/O,
    # f32+bf16 q/k/v, full (N,N)/(E,E) score matrices).  Guard before it can
    # exceed the scoped VMEM limit (v7x has half the VMEM of v5e/v6e).
    est = (2 * N * E * 2              # x block, double-buffered, bf16
           + 2 * N * E * 4            # output block, double-buffered, f32
           + 3 * (E * E * 2 + E * 4)  # weights (bf16) + biases (f32)
           + 6 * N * E * 4            # q/k/v in f32 and bf16 copies
           + (N * N + E * E) * 8)     # score + prob matrices, f32
    assert est < vmem_limit_bytes, (
        "resident footprint too large for VMEM; flash-tile the row attention")
    # TODO(synk): for large N, switch the row attention to an online-softmax
    # flash tiling over the key/value axis instead of materializing (N, N).

    out = pl.pallas_call(
        _axial_attn_kernel,
        out_shape=jax.ShapeDtypeStruct((B, N, E), jnp.float32),
        grid_spec=pltpu.PrefetchScalarGridSpec(
            num_scalar_prefetch=0,
            grid=(B,),
            in_specs=[
                pl.BlockSpec((1, N, E), lambda b: (b, 0, 0)),
                # Grid-invariant weight/bias blocks: index_map is constant in b,
                # so the pipeline elides re-DMA across grid steps.
                pl.BlockSpec((E, E), lambda b: (0, 0)),
                pl.BlockSpec((E, E), lambda b: (0, 0)),
                pl.BlockSpec((E, E), lambda b: (0, 0)),
                pl.BlockSpec((1, E), lambda b: (0, 0)),
                pl.BlockSpec((1, E), lambda b: (0, 0)),
                pl.BlockSpec((1, E), lambda b: (0, 0)),
            ],
            out_specs=pl.BlockSpec((1, N, E), lambda b: (b, 0, 0)),
        ),
        compiler_params=pltpu.CompilerParams(
            dimension_semantics=("parallel",),
            vmem_limit_bytes=vmem_limit_bytes),
    )(x, params["w_q"], params["w_k"], params["w_v"],
      params["b_q"], params["b_k"], params["b_v"])
    return out


def _reference(x_bchw, w_qkv, b_qkv, embed_dim):
    """Pure-JAX (f32) reference mirroring the PyTorch forward exactly."""
    B, C, H, W = x_bchw.shape
    E = embed_dim
    N = (C * H * W) // E
    x = x_bchw.reshape(B, N, E)
    scale = float(E) ** 0.5
    qkv = jnp.einsum("bne,fe->bnf", x, w_qkv) + b_qkv
    q, k, v = qkv[..., :E], qkv[..., E:2 * E], qkv[..., 2 * E:]
    attn_row = jax.nn.softmax(jnp.einsum("bne,bme->bnm", q, k) / scale, axis=-1)
    out_row = jnp.einsum("bnm,bme->bne", attn_row, v)
    qT, kT, vT = (jnp.swapaxes(t, 1, 2) for t in (q, k, v))
    attn_col = jax.nn.softmax(jnp.einsum("ben,bfn->bef", qT, kT) / scale, axis=-1)
    out_col = jnp.einsum("bef,bfn->ben", attn_col, vT)
    return out_row + jnp.swapaxes(out_col, 1, 2)


if __name__ == "__main__":
    # Small shapes consistent with the module: B=2, C=4, H=W=16, embed_dim=32
    # -> N = (4*16*16)/32 = 32 tokens of dim 32.
    B, C, H, W = 2, 4, 16, 16
    embed_dim = 32
    num_classes = 10  # classifier is unused in forward

    key = jax.random.PRNGKey(0)
    kx, kw, kb, kcw, kcb = jax.random.split(key, 5)

    x = jax.random.uniform(kx, (B, C, H, W), dtype=jnp.float32)

    # Deterministic PyTorch-style Linear init: U(-1/sqrt(fan_in), 1/sqrt(fan_in)).
    bound = 1.0 / (embed_dim ** 0.5)
    w_qkv = jax.random.uniform(kw, (3 * embed_dim, embed_dim), jnp.float32,
                               minval=-bound, maxval=bound)
    b_qkv = jax.random.uniform(kb, (3 * embed_dim,), jnp.float32,
                               minval=-bound, maxval=bound)
    # classifier params (unused in forward) — created for parity with __init__.
    w_cls = jax.random.uniform(kcw, (num_classes, embed_dim), jnp.float32,
                               minval=-bound, maxval=bound)
    b_cls = jax.random.uniform(kcb, (num_classes,), jnp.float32,
                               minval=-bound, maxval=bound)

    params = prepare_params(w_qkv, b_qkv, embed_dim)  # one-time, off hot path
    out = axial_self_attention(x, params, embed_dim)
    out = jax.block_until_ready(out)

    ref = _reference(x, w_qkv, b_qkv, embed_dim)
    assert out.shape == (B, (C * H * W) // embed_dim, embed_dim)
    # Tolerance loosened for bf16 MXU operands (f32 accumulation / softmax).
    assert jnp.allclose(out, ref, atol=3e-2, rtol=3e-2)

    print("KERNEL_OK")
</pallas_src>

<mosaic_0001>
module attributes {stable_mosaic.version = 11 : i64} {
  func.func @_axial_attn_kernel(%arg0: i32, %arg1: memref<1x32x32xbf16, #tpu.memory_space<vmem>>, %arg2: memref<32x32xbf16, #tpu.memory_space<vmem>>, %arg3: memref<32x32xbf16, #tpu.memory_space<vmem>>, %arg4: memref<32x32xbf16, #tpu.memory_space<vmem>>, %arg5: memref<1x32xf32, #tpu.memory_space<vmem>>, %arg6: memref<1x32xf32, #tpu.memory_space<vmem>>, %arg7: memref<1x32xf32, #tpu.memory_space<vmem>>, %arg8: memref<1x32x32xf32, #tpu.memory_space<vmem>>) attributes {dimension_semantics = [#tpu.dimension_semantics<parallel>], iteration_bounds = array<i64: 2>, scalar_prefetch = 0 : i64, scratch_operands = 0 : i64, tpu.core_type = #tpu.core_type<tc>, window_params = [{transform_indices = @transform_0, window_bounds = array<i64: 1, 32, 32>}, {pipeline_mode = #tpu.pipeline_mode<synchronous>, transform_indices = @transform_1, window_bounds = array<i64: 32, 32>}, {pipeline_mode = #tpu.pipeline_mode<synchronous>, transform_indices = @transform_2, window_bounds = array<i64: 32, 32>}, {pipeline_mode = #tpu.pipeline_mode<synchronous>, transform_indices = @transform_3, window_bounds = array<i64: 32, 32>}, {pipeline_mode = #tpu.pipeline_mode<synchronous>, transform_indices = @transform_4, window_bounds = array<i64: 1, 32>}, {pipeline_mode = #tpu.pipeline_mode<synchronous>, transform_indices = @transform_5, window_bounds = array<i64: 1, 32>}, {pipeline_mode = #tpu.pipeline_mode<synchronous>, transform_indices = @transform_6, window_bounds = array<i64: 1, 32>}, {transform_indices = @transform_7, window_bounds = array<i64: 1, 32, 32>}]} {
    %c0 = arith.constant 0 : index
    %c0_0 = arith.constant 0 : index
    %c0_1 = arith.constant 0 : index
    %0 = vector.load %arg1[%c0, %c0_0, %c0_1] : memref<1x32x32xbf16, #tpu.memory_space<vmem>>, vector<1x32x32xbf16>
    %1 = vector.shape_cast %0 : vector<1x32x32xbf16> to vector<32x32xbf16>
    %c0_2 = arith.constant 0 : index
    %c0_3 = arith.constant 0 : index
    %2 = vector.load %arg2[%c0_2, %c0_3] : memref<32x32xbf16, #tpu.memory_space<vmem>>, vector<32x32xbf16>
    %cst = arith.constant dense<0.000000e+00> : vector<32x32xf32>
    %3 = tpu.matmul %1, %2, %cst {dimension_numbers = #tpu.dot_dimension_numbers<[1], [1], [0], [0], [0, 0, 1, 0], [], []>} : vector<32x32xbf16>, vector<32x32xbf16>, vector<32x32xf32> -> vector<32x32xf32>
    %c0_4 = arith.constant 0 : index
    %c0_5 = arith.constant 0 : index
    %4 = vector.load %arg5[%c0_4, %c0_5] : memref<1x32xf32, #tpu.memory_space<vmem>>, vector<1x32xf32>
    %5 = vector.broadcast %4 : vector<1x32xf32> to vector<32x32xf32>
    %6 = arith.addf %3, %5 : vector<32x32xf32>
    %c0_6 = arith.constant 0 : index
    %c0_7 = arith.constant 0 : index
    %7 = vector.load %arg3[%c0_6, %c0_7] : memref<32x32xbf16, #tpu.memory_space<vmem>>, vector<32x32xbf16>
    %cst_8 = arith.constant dense<0.000000e+00> : vector<32x32xf32>
    %8 = tpu.matmul %1, %7, %cst_8 {dimension_numbers = #tpu.dot_dimension_numbers<[1], [1], [0], [0], [0, 0, 1, 0], [], []>} : vector<32x32xbf16>, vector<32x32xbf16>, vector<32x32xf32> -> vector<32x32xf32>
    %c0_9 = arith.constant 0 : index
    %c0_10 = arith.constant 0 : index
    %9 = vector.load %arg6[%c0_9, %c0_10] : memref<1x32xf32, #tpu.memory_space<vmem>>, vector<1x32xf32>
    %10 = vector.broadcast %9 : vector<1x32xf32> to vector<32x32xf32>
    %11 = arith.addf %8, %10 : vector<32x32xf32>
    %c0_11 = arith.constant 0 : index
    %c0_12 = arith.constant 0 : index
    %12 = vector.load %arg4[%c0_11, %c0_12] : memref<32x32xbf16, #tpu.memory_space<vmem>>, vector<32x32xbf16>
    %cst_13 = arith.constant dense<0.000000e+00> : vector<32x32xf32>
    %13 = tpu.matmul %1, %12, %cst_13 {dimension_numbers = #tpu.dot_dimension_numbers<[1], [1], [0], [0], [0, 0, 1, 0], [], []>} : vector<32x32xbf16>, vector<32x32xbf16>, vector<32x32xf32> -> vector<32x32xf32>
    %c0_14 = arith.constant 0 : index
    %c0_15 = arith.constant 0 : index
    %14 = vector.load %arg7[%c0_14, %c0_15] : memref<1x32xf32, #tpu.memory_space<vmem>>, vector<1x32xf32>
    %15 = vector.broadcast %14 : vector<1x32xf32> to vector<32x32xf32>
    %16 = arith.addf %13, %15 : vector<32x32xf32>
    %17 = arith.truncf %6 : vector<32x32xf32> to vector<32x32xbf16>
    %18 = arith.truncf %11 : vector<32x32xf32> to vector<32x32xbf16>
    %19 = arith.truncf %16 : vector<32x32xf32> to vector<32x32xbf16>
    %cst_16 = arith.constant dense<0.000000e+00> : vector<32x32xf32>
    %20 = tpu.matmul %17, %18, %cst_16 {dimension_numbers = #tpu.dot_dimension_numbers<[1], [1], [0], [0], [0, 0, 1, 0], [], []>} : vector<32x32xbf16>, vector<32x32xbf16>, vector<32x32xf32> -> vector<32x32xf32>
    %cst_17 = arith.constant dense<0xFF800000> : vector<32xf32>
    %21 = vector.multi_reduction <maximumf>, %20, %cst_17 [1] : vector<32x32xf32> to vector<32xf32>
    %22 = vector.shape_cast %21 : vector<32xf32> to vector<32x1xf32>
    %23 = vector.broadcast %22 : vector<32x1xf32> to vector<32x32xf32>
    %24 = arith.subf %20, %23 : vector<32x32xf32>
    %25 = math.exp %24 : vector<32x32xf32>
    %cst_18 = arith.constant dense<0.000000e+00> : vector<32xf32>
    %26 = vector.multi_reduction <add>, %25, %cst_18 [1] : vector<32x32xf32> to vector<32xf32>
    %27 = vector.shape_cast %26 : vector<32xf32> to vector<32x1xf32>
    %28 = tpu.reciprocal %27 {approx = true} : vector<32x1xf32> -> vector<32x1xf32>
    %29 = vector.broadcast %28 : vector<32x1xf32> to vector<32x32xf32>
    %30 = arith.mulf %25, %29 : vector<32x32xf32>
    %31 = arith.truncf %30 : vector<32x32xf32> to vector<32x32xbf16>
    %cst_19 = arith.constant dense<0.000000e+00> : vector<32x32xf32>
    %32 = tpu.matmul %31, %19, %cst_19 {dimension_numbers = #tpu.dot_dimension_numbers<[1], [0], [0], [1], [0, 0, 1, 1], [], []>} : vector<32x32xbf16>, vector<32x32xbf16>, vector<32x32xf32> -> vector<32x32xf32>
    %cst_20 = arith.constant dense<0.000000e+00> : vector<32x32xf32>
    %33 = tpu.matmul %17, %18, %cst_20 {dimension_numbers = #tpu.dot_dimension_numbers<[0], [0], [1], [1], [0, 1, 1, 1], [], []>} : vector<32x32xbf16>, vector<32x32xbf16>, vector<32x32xf32> -> vector<32x32xf32>
    %cst_21 = arith.constant dense<0xFF800000> : vector<32xf32>
    %34 = vector.multi_reduction <maximumf>, %33, %cst_21 [1] : vector<32x32xf32> to vector<32xf32>
    %35 = vector.shape_cast %34 : vector<32xf32> to vector<32x1xf32>
    %36 = vector.broadcast %35 : vector<32x1xf32> to vector<32x32xf32>
    %37 = arith.subf %33, %36 : vector<32x32xf32>
    %38 = math.exp %37 : vector<32x32xf32>
    %cst_22 = arith.constant dense<0.000000e+00> : vector<32xf32>
    %39 = vector.multi_reduction <add>, %38, %cst_22 [1] : vector<32x32xf32> to vector<32xf32>
    %40 = vector.shape_cast %39 : vector<32xf32> to vector<32x1xf32>
    %41 = tpu.reciprocal %40 {approx = true} : vector<32x1xf32> -> vector<32x1xf32>
    %42 = vector.broadcast %41 : vector<32x1xf32> to vector<32x32xf32>
    %43 = arith.mulf %38, %42 : vector<32x32xf32>
    %44 = arith.truncf %43 : vector<32x32xf32> to vector<32x32xbf16>
    %cst_23 = arith.constant dense<0.000000e+00> : vector<32x32xf32>
    %45 = tpu.matmul %19, %44, %cst_23 {dimension_numbers = #tpu.dot_dimension_numbers<[1], [1], [0], [0], [0, 0, 1, 0], [], []>} : vector<32x32xbf16>, vector<32x32xbf16>, vector<32x32xf32> -> vector<32x32xf32>
    %46 = arith.addf %32, %45 : vector<32x32xf32>
    %c0_24 = arith.constant 0 : index
    %c0_25 = arith.constant 0 : index
    %c0_26 = arith.constant 0 : index
    %47 = vector.load %arg8[%c0_24, %c0_25, %c0_26] : memref<1x32x32xf32, #tpu.memory_space<vmem>>, vector<1x32x32xf32>
    %48 = vector.shape_cast %47 : vector<1x32x32xf32> to vector<32x32xf32>
    %49 = vector.shape_cast %46 : vector<32x32xf32> to vector<1x32x32xf32>
    tpu.vector_store %arg8[%c0_24, %c0_25, %c0_26], %49 {strides = array<i32>} : memref<1x32x32xf32, #tpu.memory_space<vmem>>, vector<1x32x32xf32>,
    return
  }
  func.func @transform_0(%arg0: i32) -> (i32, i32, i32) {
    %c0_i32 = arith.constant 0 : i32
    %c0_i32_0 = arith.constant 0 : i32
    %c0_i32_1 = arith.constant 0 : i32
    return %arg0, %c0_i32, %c0_i32_0 : i32, i32, i32
  }
  func.func @transform_1(%arg0: i32) -> (i32, i32) {
    %c0_i32 = arith.constant 0 : i32
    %c0_i32_0 = arith.constant 0 : i32
    %c0_i32_1 = arith.constant 0 : i32
    return %c0_i32, %c0_i32_0 : i32, i32
  }
  func.func @transform_2(%arg0: i32) -> (i32, i32) {
    %c0_i32 = arith.constant 0 : i32
    %c0_i32_0 = arith.constant 0 : i32
    %c0_i32_1 = arith.constant 0 : i32
    return %c0_i32, %c0_i32_0 : i32, i32
  }
  func.func @transform_3(%arg0: i32) -> (i32, i32) {
    %c0_i32 = arith.constant 0 : i32
    %c0_i32_0 = arith.constant 0 : i32
    %c0_i32_1 = arith.constant 0 : i32
    return %c0_i32, %c0_i32_0 : i32, i32
  }
  func.func @transform_4(%arg0: i32) -> (i32, i32) {
    %c0_i32 = arith.constant 0 : i32
    %c0_i32_0 = arith.constant 0 : i32
    %c0_i32_1 = arith.constant 0 : i32
    return %c0_i32, %c0_i32_0 : i32, i32
  }
  func.func @transform_5(%arg0: i32) -> (i32, i32) {
    %c0_i32 = arith.constant 0 : i32
    %c0_i32_0 = arith.constant 0 : i32
    %c0_i32_1 = arith.constant 0 : i32
    return %c0_i32, %c0_i32_0 : i32, i32
  }
  func.func @transform_6(%arg0: i32) -> (i32, i32) {
    %c0_i32 = arith.constant 0 : i32
    %c0_i32_0 = arith.constant 0 : i32
    %c0_i32_1 = arith.constant 0 : i32
    return %c0_i32, %c0_i32_0 : i32, i32
  }
  func.func @transform_7(%arg0: i32) -> (i32, i32, i32) {
    %c0_i32 = arith.constant 0 : i32
    %c0_i32_0 = arith.constant 0 : i32
    %c0_i32_1 = arith.constant 0 : i32
    return %arg0, %c0_i32, %c0_i32_0 : i32, i32, i32
  }
}

</mosaic_0001>

<llo_original>
// kernel: tpu_custom_call.1
$region0: #{tpu_custom_call.1}
  #allocation0 [shape = 'u32[]', space=smem, size = 0x4, offset = 0x4, fixed_abs, tag = 'smem constant byte address 0x4 - core index']
  #allocation1 [shape = 'u32[72,128]{1,0:T(1,128)}', space=vmem, size = 0x9000, scoped, tag = 'internal scratch']
  %s0 = inlined_call_operand.hbm [shape: bf16[2,32,32], index: 0, kind: input, shape index: {}]
  %s1 = inlined_call_operand.hbm [shape: bf16[32,32], index: 1, kind: input, shape index: {}]
  %s2 = inlined_call_operand.hbm [shape: bf16[32,32], index: 2, kind: input, shape index: {}]
  %s3 = inlined_call_operand.hbm [shape: bf16[32,32], index: 3, kind: input, shape index: {}]
  %s4 = inlined_call_operand.vmem [shape: f32[1,32], index: 4, kind: input, shape index: {}]
  %s5 = inlined_call_operand.vmem [shape: f32[1,32], index: 5, kind: input, shape index: {}]
  %s6 = inlined_call_operand.vmem [shape: f32[1,32], index: 6, kind: input, shape index: {}]
  %s7 = inlined_call_operand.hbm [shape: f32[2,32,32], index: 7, kind: output, shape index: {}]
  %s8 = sld [smem:[#allocation0]]
  $region77: #{tpu_custom_call.1} parent=0
    _
  %s10 = ssub.s32 1, %s8
  %s11 = scalar_select 0, %s10, %s8
  $region1: #{tpu_custom_call.1} parent=0
    #allocation2 [shape = 'u8[16384]{0}', space=vmem, size = 0x4000, scoped, tag = 'input window, operand 0']
    #allocation3 [shape = 's32[2]{0}', space=sflag, size = 0x8, scoped, tag = 'scoped memory for tpu_custom_call.1']
    #allocation4 [shape = 's32[2]{0}', space=sflag, size = 0x8, scoped, tag = 'scoped memory for tpu_custom_call.1']
    #allocation5 [shape = 'u8[8192]{0}', space=vmem, size = 0x2000, scoped, tag = 'input window, operand 1, single buffered']
    #allocation6 [shape = 's32[1]{0}', space=sflag, size = 0x4, scoped, tag = 'scoped memory for tpu_custom_call.1']
    #allocation7 [shape = 'u8[8192]{0}', space=vmem, size = 0x2000, scoped, tag = 'input window, operand 2, single buffered']
    #allocation8 [shape = 'u8[8192]{0}', space=vmem, size = 0x2000, scoped, tag = 'input window, operand 3, single buffered']
    #allocation9 [shape = 's32[1]{0}', space=sflag, size = 0x4, scoped, tag = 'scoped memory for tpu_custom_call.1']
    #allocation10 [shape = 'u8[32768]{0}', space=vmem, size = 0x8000, scoped, tag = 'output window, operand 0']
    %12 = vsyncpa [#allocation3], 0
    %s13 = scalar_lea.sflag [#allocation3], 1
    %14 = vsyncpa %s13, 0
    %15 = vsyncpa [#allocation6], 0
    %16 = vsyncpa [#allocation9], 0
    %17 = vsyncpa [#allocation4], 0
    %s18 = scalar_lea.sflag [#allocation4], 1
    %19 = vsyncpa %s18, 0
    loop: start=0, step=1, limit=4
    $region2: #{tpu_custom_call.1} parent=1 // loop_pre_header
      _
    $region3: #{tpu_custom_call.1} parent=1 // loop_header
      %s21 = sphi 0, %s25
      %p22 = scmp.ge.s32.totalorder %s21, 4
      %s31 = sphi 0, %s33
      %s34 = sphi 0, %s31
      %s35 = sphi 0, %s34
      %s51 = sphi 0, %s35
      %s55 = sphi 0, %s55
      %s57 = sphi 0, %s55
      %s58 = sphi 0, %s57
      %s72 = sphi 0, %s58
      %s76 = sphi 0, %s76
      %s78 = sphi 0, %s76
      %s79 = sphi 0, %s78
      %s93 = sphi 0, %s79
      %s97 = sphi 0, %s97
      %s99 = sphi 0, %s97
      %s100 = sphi 0, %s99
      %s114 = sphi 0, %s100
      %s118 = sphi 0, %s118
      %s120 = sphi 0, %s118
      %s121 = sphi 0, %s120
      %s135 = sphi 0, %s121
      %s139 = sphi 0, %s139
      %s141 = sphi 0, %s139
      %s142 = sphi 0, %s141
      %s156 = sphi 0, %s142
      %s160 = sphi 0, %s160
      %s162 = sphi 0, %s160
      %s163 = sphi 0, %s162
      %s177 = sphi 0, %s163
      %s183 = sphi 0, %s185
      %s186 = sphi 0, %s183
      %s187 = sphi 0, %s186
      %s203 = sphi 0, %s187
    $region4: #{tpu_custom_call.1} parent=1 // loop_header_branch
      %24 = sbr.rel (%p22) target = $region8
    $region5: #{tpu_custom_call.1} parent=1 // loop_body
      %s26 = ssub.s32 %s21, 1
      %s27 = ssub.s32 %s21, 2
      %s28 = sadd.s32 %s21, 1
      %s29 = ssub.s32 %s21, %s28
      %p30 = scmp.eq.s32.totalorder %s29, 0
      %s32 = sadd.s32 %s31, 1
      %s33 = scalar_select %p30, %s31, %s32
      %p36 = pneg %p30
      %p37 = scmp.eq.s32.totalorder %s21, 1
      %p38 = por %p36, %p37
      %p39 = scmp.ne.s32.totalorder %s31, %s34
      %p40 = scmp.eq.s32.totalorder %s21, 0
      %p41 = por %p39, %p40
      %p42 = scmp.ne.s32.totalorder %s31, %s34
      %p43 = scmp.eq.s32.totalorder %s26, 1
      %p44 = por %p42, %p43
      %p45 = scmp.ne.s32.totalorder %s34, %s35
      %p46 = scmp.eq.s32.totalorder %s26, 0
      %p47 = por %p45, %p46
      %p48 = scmp.ne.s32.totalorder %s34, %s35
      %p49 = scmp.eq.s32.totalorder %s27, 1
      %p50 = por %p48, %p49
      %p52 = scmp.ne.s32.totalorder %s35, %s51
      %p53 = scmp.eq.s32.totalorder %s27, 0
      %p54 = por %p52, %p53
      %s56 = sadd.s32 %s55, 1
      %p59 = scmp.eq.s32.totalorder %s21, 1
      %p60 = scmp.ne.s32.totalorder %s55, %s57
      %p61 = scmp.eq.s32.totalorder %s21, 0
      %p62 = por %p60, %p61
      %p63 = scmp.ne.s32.totalorder %s55, %s57
      %p64 = scmp.eq.s32.totalorder %s26, 1
      %p65 = por %p63, %p64
      %p66 = scmp.ne.s32.totalorder %s57, %s58
      %p67 = scmp.eq.s32.totalorder %s26, 0
      %p68 = por %p66, %p67
      %p69 = scmp.ne.s32.totalorder %s57, %s58
      %p70 = scmp.eq.s32.totalorder %s27, 1
      %p71 = por %p69, %p70
      %p73 = scmp.ne.s32.totalorder %s58, %s72
      %p74 = scmp.eq.s32.totalorder %s27, 0
      %p75 = por %p73, %p74
      %s77 = sadd.s32 %s76, 1
      %p80 = scmp.eq.s32.totalorder %s21, 1
      %p81 = scmp.ne.s32.totalorder %s76, %s78
      %p82 = scmp.eq.s32.totalorder %s21, 0
      %p83 = por %p81, %p82
      %p84 = scmp.ne.s32.totalorder %s76, %s78
      %p85 = scmp.eq.s32.totalorder %s26, 1
      %p86 = por %p84, %p85
      %p87 = scmp.ne.s32.totalorder %s78, %s79
      %p88 = scmp.eq.s32.totalorder %s26, 0
      %p89 = por %p87, %p88
      %p90 = scmp.ne.s32.totalorder %s78, %s79
      %p91 = scmp.eq.s32.totalorder %s27, 1
      %p92 = por %p90, %p91
      %p94 = scmp.ne.s32.totalorder %s79, %s93
      %p95 = scmp.eq.s32.totalorder %s27, 0
      %p96 = por %p94, %p95
      %s98 = sadd.s32 %s97, 1
      %p101 = scmp.eq.s32.totalorder %s21, 1
      %p102 = scmp.ne.s32.totalorder %s97, %s99
      %p103 = scmp.eq.s32.totalorder %s21, 0
      %p104 = por %p102, %p103
      %p105 = scmp.ne.s32.totalorder %s97, %s99
      %p106 = scmp.eq.s32.totalorder %s26, 1
      %p107 = por %p105, %p106
      %p108 = scmp.ne.s32.totalorder %s99, %s100
      %p109 = scmp.eq.s32.totalorder %s26, 0
      %p110 = por %p108, %p109
      %p111 = scmp.ne.s32.totalorder %s99, %s100
      %p112 = scmp.eq.s32.totalorder %s27, 1
      %p113 = por %p111, %p112
      %p115 = scmp.ne.s32.totalorder %s100, %s114
      %p116 = scmp.eq.s32.totalorder %s27, 0
      %p117 = por %p115, %p116
      %s119 = sadd.s32 %s118, 1
      %p122 = scmp.eq.s32.totalorder %s21, 1
      %p123 = scmp.ne.s32.totalorder %s118, %s120
      %p124 = scmp.eq.s32.totalorder %s21, 0
      %p125 = por %p123, %p124
      %p126 = scmp.ne.s32.totalorder %s118, %s120
      %p127 = scmp.eq.s32.totalorder %s26, 1
      %p128 = por %p126, %p127
      %p129 = scmp.ne.s32.totalorder %s120, %s121
      %p130 = scmp.eq.s32.totalorder %s26, 0
      %p131 = por %p129, %p130
      %p132 = scmp.ne.s32.totalorder %s120, %s121
      %p133 = scmp.eq.s32.totalorder %s27, 1
      %p134 = por %p132, %p133
      %p136 = scmp.ne.s32.totalorder %s121, %s135
      %p137 = scmp.eq.s32.totalorder %s27, 0
      %p138 = por %p136, %p137
      %s140 = sadd.s32 %s139, 1
      %p143 = scmp.eq.s32.totalorder %s21, 1
      %p144 = scmp.ne.s32.totalorder %s139, %s141
      %p145 = scmp.eq.s32.totalorder %s21, 0
      %p146 = por %p144, %p145
      %p147 = scmp.ne.s32.totalorder %s139, %s141
      %p148 = scmp.eq.s32.totalorder %s26, 1
      %p149 = por %p147, %p148
      %p150 = scmp.ne.s32.totalorder %s141, %s142
      %p151 = scmp.eq.s32.totalorder %s26, 0
      %p152 = por %p150, %p151
      %p153 = scmp.ne.s32.totalorder %s141, %s142
      %p154 = scmp.eq.s32.totalorder %s27, 1
      %p155 = por %p153, %p154
      %p157 = scmp.ne.s32.totalorder %s142, %s156
      %p158 = scmp.eq.s32.totalorder %s27, 0
      %p159 = por %p157, %p158
      %s161 = sadd.s32 %s160, 1
      %p164 = scmp.eq.s32.totalorder %s21, 1
      %p165 = scmp.ne.s32.totalorder %s160, %s162
      %p166 = scmp.eq.s32.totalorder %s21, 0
      %p167 = por %p165, %p166
      %p168 = scmp.ne.s32.totalorder %s160, %s162
      %p169 = scmp.eq.s32.totalorder %s26, 1
      %p170 = por %p168, %p169
      %p171 = scmp.ne.s32.totalorder %s162, %s163
      %p172 = scmp.eq.s32.totalorder %s26, 0
      %p173 = por %p171, %p172
      %p174 = scmp.ne.s32.totalorder %s162, %s163
      %p175 = scmp.eq.s32.totalorder %s27, 1
      %p176 = por %p174, %p175
      %p178 = scmp.ne.s32.totalorder %s163, %s177
      %p179 = scmp.eq.s32.totalorder %s27, 0
      %p180 = por %p178, %p179
      %s181 = ssub.s32 %s21, %s28
      %p182 = scmp.eq.s32.totalorder %s181, 0
      %s184 = sadd.s32 %s183, 1
      %s185 = scalar_select %p182, %s183, %s184
      %p188 = pneg %p182
      %p189 = scmp.eq.s32.totalorder %s21, 1
      %p190 = por %p188, %p189
      %p191 = scmp.ne.s32.totalorder %s183, %s186
      %p192 = scmp.eq.s32.totalorder %s21, 0
      %p193 = por %p191, %p192
      %p194 = scmp.ne.s32.totalorder %s183, %s186
      %p195 = scmp.eq.s32.totalorder %s26, 1
      %p196 = por %p194, %p195
      %p197 = scmp.ne.s32.totalorder %s186, %s187
      %p198 = scmp.eq.s32.totalorder %s26, 0
      %p199 = por %p197, %p198
      %p200 = scmp.ne.s32.totalorder %s186, %s187
      %p201 = scmp.eq.s32.totalorder %s27, 1
      %p202 = por %p200, %p201
      %p204 = scmp.ne.s32.totalorder %s187, %s203
      %p205 = scmp.eq.s32.totalorder %s27, 0
      %p206 = por %p204, %p205
      %p207 = scmp.le.s32.totalorder 1, %s21
      %p208 = scmp.lt.s32.totalorder %s21, 3
      %p209 = pnand %p207, %p208
      %p210 = pneg %p209
      // Predicated region
      $region9: #{tpu_custom_call.1} parent=5 // pred_check
        _
      $region10: #{tpu_custom_call.1} parent=5 // pred_check_branch
        %212 = sbr.rel (%p209) target = $region12
      $region11: #{tpu_custom_call.1} parent=5 // pred_region
        %s213 = ssub.s32 %s21, 1
        // Predicated region
        $region13: #{tpu_custom_call.1} parent=11 // pred_check
          %p214 = pneg %p68
        $region14: #{tpu_custom_call.1} parent=11 // pred_check_branch
          %216 = sbr.rel (%p214) target = $region16
        $region15: #{tpu_custom_call.1} parent=11 // pred_region
          %218 = vsyncadd [#allocation6], 0
          %s219 = sshll.u32 %s1, 4
          %s220 = int_to_ptr.hbm [resolvable:$true] %s219
          %s221 = sshll.u32 [#allocation5], 4
          %s222 = int_to_ptr.vmem [resolvable:$true] %s221
          %227 = dma.hbm_to_vmem [thread:$0]  %s220, 256, %s222, [#allocation6], 64, 64, 4
        $region16: #{tpu_custom_call.1} parent=11 // pred_fallthru
          _
        // Predicated region
        $region17: #{tpu_custom_call.1} parent=11 // pred_check
          %p228 = pneg %p89
        $region18: #{tpu_custom_call.1} parent=11 // pred_check_branch
          %230 = sbr.rel (%p228) target = $region20
        $region19: #{tpu_custom_call.1} parent=11 // pred_region
          %232 = vsyncadd [#allocation6], 0
          %s233 = sshll.u32 %s2, 4
          %s234 = int_to_ptr.hbm [resolvable:$true] %s233
          %s235 = sshll.u32 [#allocation7], 4
          %s236 = int_to_ptr.vmem [resolvable:$true] %s235
          %241 = dma.hbm_to_vmem [thread:$0]  %s234, 256, %s236, [#allocation6], 64, 64, 4
        $region20: #{tpu_custom_call.1} parent=11 // pred_fallthru
          _
        // Predicated region
        $region21: #{tpu_custom_call.1} parent=11 // pred_check
          %p242 = pneg %p110
        $region22: #{tpu_custom_call.1} parent=11 // pred_check_branch
          %244 = sbr.rel (%p242) target = $region24
        $region23: #{tpu_custom_call.1} parent=11 // pred_region
          %246 = vsyncadd [#allocation9], 0
          %s247 = sshll.u32 %s3, 4
          %s248 = int_to_ptr.hbm [resolvable:$true] %s247
          %s249 = sshll.u32 [#allocation8], 4
          %s250 = int_to_ptr.vmem [resolvable:$true] %s249
          %255 = dma.hbm_to_vmem [thread:$0]  %s248, 256, %s250, [#allocation9], 64, 64, 4
        $region24: #{tpu_custom_call.1} parent=11 // pred_fallthru
          _
        // Predicated region
        $region25: #{tpu_custom_call.1} parent=11 // pred_check
          %p256 = pneg %p131
        $region26: #{tpu_custom_call.1} parent=11 // pred_check_branch
          %258 = sbr.rel (%p256) target = $region28
        $region27: #{tpu_custom_call.1} parent=11 // pred_region
          _
        $region28: #{tpu_custom_call.1} parent=11 // pred_fallthru
          _
        // Predicated region
        $region29: #{tpu_custom_call.1} parent=11 // pred_check
          %p259 = pneg %p152
        $region30: #{tpu_custom_call.1} parent=11 // pred_check_branch
          %261 = sbr.rel (%p259) target = $region32
        $region31: #{tpu_custom_call.1} parent=11 // pred_region
          _
        $region32: #{tpu_custom_call.1} parent=11 // pred_fallthru
          _
        // Predicated region
        $region33: #{tpu_custom_call.1} parent=11 // pred_check
          %p262 = pneg %p173
        $region34: #{tpu_custom_call.1} parent=11 // pred_check_branch
          %264 = sbr.rel (%p262) target = $region36
        $region35: #{tpu_custom_call.1} parent=11 // pred_region
          _
        $region36: #{tpu_custom_call.1} parent=11 // pred_fallthru
          _
      $region12: #{tpu_custom_call.1} parent=5 // pred_fallthru
        _
      %p265 = scmp.lt.s32.totalorder %s21, 2
      // Predicated region
      $region37: #{tpu_custom_call.1} parent=5 // pred_check
        %p266 = pneg %p265
      $region38: #{tpu_custom_call.1} parent=5 // pred_check_branch
        %268 = sbr.rel (%p266) target = $region40
      $region39: #{tpu_custom_call.1} parent=5 // pred_region
        // Predicated region
        $region41: #{tpu_custom_call.1} parent=39 // pred_check
          %p269 = pneg %p41
        $region42: #{tpu_custom_call.1} parent=39 // pred_check_branch
          %271 = sbr.rel (%p269) target = $region44
        $region43: #{tpu_custom_call.1} parent=39 // pred_region
          %s272 = sand.u32 %s31, 1
          %s273 = scalar_lea.sflag [#allocation3], %s272
          %s274 = sand.u32 %s31, 1
          %s275 = smul.addr %s274, 16
          %s276 = scalar_lea.vmem [#allocation2], %s275
          %278 = vsyncadd %s273, 0
          %s279 = smul.addr %s21, 4
          %s280 = smul.addr %s279, 4
          %s281 = scalar_lea.hbm %s0, %s280
          %s282 = sshll.u32 %s281, 4
          %s283 = int_to_ptr.hbm [resolvable:$true] %s282
          %s284 = sshll.u32 %s276, 4
          %s285 = int_to_ptr.vmem [resolvable:$true] %s284
          %290 = dma.hbm_to_vmem [thread:$0]  %s283, 256, %s285, %s273, 64, 64, 4
        $region44: #{tpu_custom_call.1} parent=39 // pred_fallthru
          _
      $region40: #{tpu_custom_call.1} parent=5 // pred_fallthru
        _
      %p291 = scmp.le.s32.totalorder 1, %s21
      %p292 = scmp.lt.s32.totalorder %s21, 3
      %p293 = pnand %p291, %p292
      %p294 = pneg %p293
      // Predicated region
      $region45: #{tpu_custom_call.1} parent=5 // pred_check
        _
      $region46: #{tpu_custom_call.1} parent=5 // pred_check_branch
        %296 = sbr.rel (%p293) target = $region48
      $region47: #{tpu_custom_call.1} parent=5 // pred_region
        %s297 = ssub.s32 %s21, 1
        %s298 = sand.u32 %s34, 1
        %s299 = scalar_lea.sflag [#allocation3], %s298
        %s300 = sand.u32 %s34, 1
        %s301 = smul.addr %s300, 16
        %s302 = scalar_lea.vmem [#allocation2], %s301
        // Predicated region
        $region49: #{tpu_custom_call.1} parent=47 // pred_check
          %p303 = pneg %p47
        $region50: #{tpu_custom_call.1} parent=47 // pred_check_branch
          %305 = sbr.rel (%p303) target = $region52
        $region51: #{tpu_custom_call.1} parent=47 // pred_region
          %307 = dma.done %s299, 256
        $region52: #{tpu_custom_call.1} parent=47 // pred_fallthru
          _
        // Predicated region
        $region53: #{tpu_custom_call.1} parent=47 // pred_check
          %p308 = pneg %p68
        $region54: #{tpu_custom_call.1} parent=47 // pred_check_branch
          %310 = sbr.rel (%p308) target = $region56
        $region55: #{tpu_custom_call.1} parent=47 // pred_region
          %312 = dma.done [#allocation6], 256
        $region56: #{tpu_custom_call.1} parent=47 // pred_fallthru
          _
        // Predicated region
        $region57: #{tpu_custom_call.1} parent=47 // pred_check
          %p313 = pneg %p89
        $region58: #{tpu_custom_call.1} parent=47 // pred_check_branch
          %315 = sbr.rel (%p313) target = $region60
        $region59: #{tpu_custom_call.1} parent=47 // pred_region
          %317 = dma.done [#allocation6], 256
        $region60: #{tpu_custom_call.1} parent=47 // pred_fallthru
          _
        // Predicated region
        $region61: #{tpu_custom_call.1} parent=47 // pred_check
          %p318 = pneg %p110
        $region62: #{tpu_custom_call.1} parent=47 // pred_check_branch
          %320 = sbr.rel (%p318) target = $region64
        $region63: #{tpu_custom_call.1} parent=47 // pred_region
          %322 = dma.done [#allocation9], 256
        $region64: #{tpu_custom_call.1} parent=47 // pred_fallthru
          _
        %s323 = sand.u32 %s34, 1
        %s324 = scalar_lea.sflag [#allocation3], %s323
        %s325 = sand.u32 %s34, 1
        %s326 = smul.addr %s325, 16
        %s327 = scalar_lea.vmem [#allocation2], %s326
        %p328 = pneg %p47
        %p329 = pneg %p44
        %p330 = pneg %p68
        %p331 = pneg %p65
        %p332 = pneg %p89
        %p333 = pneg %p86
        %p334 = pneg %p110
        %p335 = pneg %p107
        %p336 = pneg %p131
        %p337 = pneg %p128
        %p338 = pneg %p152
        %p339 = pneg %p149
        %p340 = pneg %p173
        %p341 = pneg %p170
        %p342 = pneg %p199
        %p343 = pneg %p196
        %s344 = sand.u32 %s186, 1
        %s345 = scalar_lea.sflag [#allocation4], %s344
        %s346 = sand.u32 %s186, 1
        %s347 = smul.addr %s346, 32
        %s348 = scalar_lea.vmem [#allocation10], %s347
        %v350 = vld [vmem:[%s302] sm:$0xf]
        %v351 = vld [vmem:[%s302 + $0x4] sm:$0xf]
        %v352 = vld [vmem:[%s302 + $0x8] sm:$0xf]
        %v353 = vld [vmem:[%s302 + $0xc] sm:$0xf]
        %v354 = vld [vmem:[#allocation5] sm:$0xf]
        %v355 = vld [vmem:[#allocation5 + $0x4] sm:$0xf]
        %v356 = vld [vmem:[#allocation5 + $0x8] sm:$0xf]
        %v357 = vld [vmem:[#allocation5 + $0xc] sm:$0xf]
        %v358 = vld [vmem:[%s4] sm:$0x1]
        %v360 = vperm.slane %v358, 0
        %v366 = vunpack.c.l.b16 %v350
        %v367 = vunpack.c.l.b16 %v351
        %v368 = vunpack.c.l.b16 %v352
        %v369 = vunpack.c.l.b16 %v353
        %v370 = vpack.c.b16 %v367, %v366
        %v371 = vpack.c.b16 %v369, %v368
        %v376 = vunpack.c.l.b16 %v354
        %v377 = vunpack.c.l.b16 %v355
        %v378 = vunpack.c.l.b16 %v356
        %v379 = vunpack.c.l.b16 %v357
        %v380 = vpack.c.b16 %v377, %v376
        %v381 = vpack.c.b16 %v379, %v378
        %vm382 = vcmask 261120
        %v384 = vsel %vm382, %v370, 0
        %v387 = vsel %vm382, %v371, 0
        %v390 = vsel %vm382, %v380, 0
        %v393 = vsel %vm382, %v381, 0
        %395 = vmatpush.bf16.xpose.msra.mxu0 0
        %396 = vmatpush.bf16.xpose.msra.mxu0 0
        %397 = vmatpush.bf16.xpose.msra.mxu0 0
        %398 = vmatpush.bf16.xpose.msra.mxu0 0
        %399 = vmatpush.bf16.xpose.msra.mxu0 0
        %400 = vmatpush.bf16.xpose.msra.mxu0 0
        %401 = vmatpush.bf16.xpose.msra.mxu0 %v393
        %402 = vmatpush.bf16.xpose.msra.mxu0 %v390
        %403 = vmatmul.bf16.gmra.mxu0 %v384
        %v404 = vpop.f32.mrf.mxu0
        %v405 = vadd.f32 %v360, %v404
        %v406 = vpop.f32.mrf.mxu0
        %v407 = vadd.f32 %v360, %v406
        %408 = vmatmul.bf16.gmra.mxu0 %v387
        %v409 = vpop.f32.mrf.mxu0
        %v410 = vadd.f32 %v360, %v409
        %v411 = vpop.f32.mrf.mxu0
        %v412 = vadd.f32 %v360, %v411
        %413 = vdwg.mxu0
        %v414 = vld [vmem:[#allocation7] sm:$0xf]
        %v415 = vld [vmem:[#allocation7 + $0x4] sm:$0xf]
        %v416 = vld [vmem:[#allocation7 + $0x8] sm:$0xf]
        %v417 = vld [vmem:[#allocation7 + $0xc] sm:$0xf]
        %v418 = vld [vmem:[%s5] sm:$0x1]
        %v420 = vperm.slane %v418, 0
        %v426 = vunpack.c.l.b16 %v414
        %v427 = vunpack.c.l.b16 %v415
        %v428 = vunpack.c.l.b16 %v416
        %v429 = vunpack.c.l.b16 %v417
        %v430 = vpack.c.b16 %v427, %v426
        %v431 = vpack.c.b16 %v429, %v428
        %v433 = vsel %vm382, %v430, 0
        %v436 = vsel %vm382, %v431, 0
        %438 = vmatpush.bf16.xpose.msra.mxu0 0
        %439 = vmatpush.bf16.xpose.msra.mxu0 0
        %440 = vmatpush.bf16.xpose.msra.mxu0 0
        %441 = vmatpush.bf16.xpose.msra.mxu0 0
        %442 = vmatpush.bf16.xpose.msra.mxu0 0
        %443 = vmatpush.bf16.xpose.msra.mxu0 0
        %444 = vmatpush.bf16.xpose.msra.mxu0 %v436
        %445 = vmatpush.bf16.xpose.msra.mxu0 %v433
        %446 = vmatmul.bf16.gmra.mxu0 %v384
        %v447 = vpop.f32.mrf.mxu0
        %v448 = vadd.f32 %v420, %v447
        %v449 = vpop.f32.mrf.mxu0
        %v450 = vadd.f32 %v420, %v449
        %451 = vmatmul.bf16.gmra.mxu0 %v387
        %v452 = vpop.f32.mrf.mxu0
        %v453 = vadd.f32 %v420, %v452
        %v454 = vpop.f32.mrf.mxu0
        %v455 = vadd.f32 %v420, %v454
        %456 = vdwg.mxu0
        %v457 = vld [vmem:[#allocation8] sm:$0xf]
        %v458 = vld [vmem:[#allocation8 + $0x4] sm:$0xf]
        %v459 = vld [vmem:[#allocation8 + $0x8] sm:$0xf]
        %v460 = vld [vmem:[#allocation8 + $0xc] sm:$0xf]
        %v461 = vld [vmem:[%s6] sm:$0x1]
        %v463 = vperm.slane %v461, 0
        %v469 = vunpack.c.l.b16 %v457
        %v470 = vunpack.c.l.b16 %v458
        %v471 = vunpack.c.l.b16 %v459
        %v472 = vunpack.c.l.b16 %v460
        %v473 = vpack.c.b16 %v470, %v469
        %v474 = vpack.c.b16 %v472, %v471
        %v476 = vsel %vm382, %v473, 0
        %v479 = vsel %vm382, %v474, 0
        %481 = vmatpush.bf16.xpose.msra.mxu0 0
        %482 = vmatpush.bf16.xpose.msra.mxu0 0
        %483 = vmatpush.bf16.xpose.msra.mxu0 0
        %484 = vmatpush.bf16.xpose.msra.mxu0 0
        %485 = vmatpush.bf16.xpose.msra.mxu0 0
        %486 = vmatpush.bf16.xpose.msra.mxu0 0
        %487 = vmatpush.bf16.xpose.msra.mxu0 %v479
        %488 = vmatpush.bf16.xpose.msra.mxu0 %v476
        %489 = vmatmul.bf16.gmra.mxu0 %v384
        %v490 = vpop.f32.mrf.mxu0
        %v491 = vadd.f32 %v463, %v490
        %v492 = vpop.f32.mrf.mxu0
        %v493 = vadd.f32 %v463, %v492
        %494 = vmatmul.bf16.gmra.mxu0 %v387
        %v495 = vpop.f32.mrf.mxu0
        %v496 = vadd.f32 %v463, %v495
        %v497 = vpop.f32.mrf.mxu0
        %v498 = vadd.f32 %v463, %v497
        %499 = vdwg.mxu0
        %v500 = vpack.c.bf16 %v407, %v405
        %v501 = vpack.c.bf16 %v412, %v410
        %v502 = vpack.c.bf16 %v450, %v448
        %v503 = vpack.c.bf16 %v455, %v453
        %v504 = vpack.c.bf16 %v493, %v491
        %v505 = vpack.c.bf16 %v498, %v496
        %v507 = vsel %vm382, %v500, 0
        %v510 = vsel %vm382, %v501, 0
        %v513 = vsel %vm382, %v502, 0
        %v516 = vsel %vm382, %v503, 0
        %518 = vmatpush.bf16.xpose.msra.mxu0 0
        %519 = vmatpush.bf16.xpose.msra.mxu0 0
        %520 = vmatpush.bf16.xpose.msra.mxu0 0
        %521 = vmatpush.bf16.xpose.msra.mxu0 0
        %522 = vmatpush.bf16.xpose.msra.mxu0 0
        %523 = vmatpush.bf16.xpose.msra.mxu0 0
        %524 = vmatpush.bf16.xpose.msra.mxu0 %v516
        %525 = vmatpush.bf16.xpose.msra.mxu0 %v513
        %526 = vmatmul.bf16.gmra.mxu0 %v507
        %v527 = vpop.f32.mrf.mxu0
        %v528 = vadd.f32 0.0, %v527
        %v529 = vpop.f32.mrf.mxu0
        %v530 = vadd.f32 0.0, %v529
        %531 = vmatmul.bf16.gmra.mxu0 %v510
        %v532 = vpop.f32.mrf.mxu0
        %v533 = vadd.f32 0.0, %v532
        %v534 = vpop.f32.mrf.mxu0
        %v535 = vadd.f32 0.0, %v534
        %536 = vdwg.mxu0
        %v537 = vsel %vm382, %v528, -inf
        %538 = vmax.xlane.f32.xlu0 %v537
        %v539 = vpop.xlane.xlu0 %538
        %v540 = vsel %vm382, %v530, -inf
        %541 = vmax.xlane.f32.xlu0 %v540
        %v542 = vpop.xlane.xlu0 %541
        %v543 = vsel %vm382, %v533, -inf
        %544 = vmax.xlane.f32.xlu0 %v543
        %v545 = vpop.xlane.xlu0 %544
        %v546 = vsel %vm382, %v535, -inf
        %547 = vmax.xlane.f32.xlu0 %v546
        %v548 = vpop.xlane.xlu0 %547
        %v549 = vsub.f32 %v528, %v539
        %v550 = vsub.f32 %v530, %v542
        %v551 = vsub.f32 %v533, %v545
        %v552 = vsub.f32 %v535, %v548
        %v553 = vmul.f32 %v549, 1.442695
        %v554 = vpow.pop %v553
        %v555 = vmul.f32 %v550, 1.442695
        %v556 = vpow.pop %v555
        %v557 = vmul.f32 %v551, 1.442695
        %v558 = vpow.pop %v557
        %v559 = vmul.f32 %v552, 1.442695
        %v560 = vpow.pop %v559
        %v561 = vsel %vm382, %v554, 0.0
        %562 = vadd.xlane.f32.xlu0 %v561
        %v563 = vpop.xlane.xlu0 %562
        %v564 = vsel %vm382, %v556, 0.0
        %565 = vadd.xlane.f32.xlu0 %v564
        %v566 = vpop.xlane.xlu0 %565
        %v567 = vsel %vm382, %v558, 0.0
        %568 = vadd.xlane.f32.xlu0 %v567
        %v569 = vpop.xlane.xlu0 %568
        %v570 = vsel %vm382, %v560, 0.0
        %571 = vadd.xlane.f32.xlu0 %v570
        %v572 = vpop.xlane.xlu0 %571
        %v573 = vrcp.pop %v563
        %v574 = vrcp.pop %v566
        %v575 = vrcp.pop %v569
        %v576 = vrcp.pop %v572
        %v577 = vmul.f32 %v554, %v573
        %v578 = vmul.f32 %v556, %v574
        %v579 = vmul.f32 %v558, %v575
        %v580 = vmul.f32 %v560, %v576
        %v581 = vpack.c.bf16 %v578, %v577
        %v582 = vpack.c.bf16 %v580, %v579
        %583 = vxpose.xlu0.c.b16.start [1/8] %v500, 128
        %584 = vxpose.xlu0.c.b16.cont [2/8] %v501, 128
        %585 = vxpose.xlu0.c.b16.cont [3/8] 0, 128
        %586 = vxpose.xlu0.c.b16.cont [4/8] 0, 128
        %587 = vxpose.xlu0.c.b16.cont [5/8] 0, 128
        %588 = vxpose.xlu0.c.b16.cont [6/8] 0, 128
        %589 = vxpose.xlu0.c.b16.cont [7/8] 0, 128
        %590 = vxpose.xlu0.c.b16.end [8/8] 0, 128
        %v591 = vpop.trf.xlu0
        %v592 = vpop.trf.xlu0
        %v593 = vpop.trf.xlu0
        %v594 = vpop.trf.xlu0
        %v595 = vpop.trf.xlu0
        %v596 = vpop.trf.xlu0
        %v597 = vpop.trf.xlu0
        %v598 = vpop.trf.xlu0
        %v600 = vsel %vm382, %v591, 0
        %v603 = vsel %vm382, %v592, 0
        %605 = vmatpush.bf16.msra.mxu0 0
        %606 = vmatpush.bf16.msra.mxu0 0
        %607 = vmatpush.bf16.msra.mxu0 0
        %608 = vmatpush.bf16.msra.mxu0 0
        %609 = vmatpush.bf16.msra.mxu0 0
        %610 = vmatpush.bf16.msra.mxu0 0
        %611 = vmatpush.bf16.msra.mxu0 %v503
        %612 = vmatpush.bf16.msra.mxu0 %v502
        %613 = vmatmul.bf16.gmra.mxu0 %v600
        %v614 = vpop.f32.mrf.mxu0
        %v615 = vadd.f32 0.0, %v614
        %v616 = vpop.f32.mrf.mxu0
        %v617 = vadd.f32 0.0, %v616
        %618 = vmatmul.bf16.gmra.mxu0 %v603
        %v619 = vpop.f32.mrf.mxu0
        %v620 = vadd.f32 0.0, %v619
        %v621 = vpop.f32.mrf.mxu0
        %v622 = vadd.f32 0.0, %v621
        %623 = vdwg.mxu0
        %v624 = vsel %vm382, %v615, -inf
        %625 = vmax.xlane.f32.xlu0 %v624
        %v626 = vpop.xlane.xlu0 %625
        %v627 = vsel %vm382, %v617, -inf
        %628 = vmax.xlane.f32.xlu0 %v627
        %v629 = vpop.xlane.xlu0 %628
        %v630 = vsel %vm382, %v620, -inf
        %631 = vmax.xlane.f32.xlu0 %v630
        %v632 = vpop.xlane.xlu0 %631
        %v633 = vsel %vm382, %v622, -inf
        %634 = vmax.xlane.f32.xlu0 %v633
        %v635 = vpop.xlane.xlu0 %634
        %v636 = vsub.f32 %v615, %v626
        %v637 = vsub.f32 %v617, %v629
        %v638 = vsub.f32 %v620, %v632
        %v639 = vsub.f32 %v622, %v635
        %v640 = vmul.f32 %v636, 1.442695
        %v641 = vpow.pop %v640
        %v642 = vmul.f32 %v637, 1.442695
        %v643 = vpow.pop %v642
        %v644 = vmul.f32 %v638, 1.442695
        %v645 = vpow.pop %v644
        %v646 = vmul.f32 %v639, 1.442695
        %v647 = vpow.pop %v646
        %v648 = vsel %vm382, %v641, 0.0
        %649 = vadd.xlane.f32.xlu0 %v648
        %v650 = vpop.xlane.xlu0 %649
        %v651 = vsel %vm382, %v643, 0.0
        %652 = vadd.xlane.f32.xlu0 %v651
        %v653 = vpop.xlane.xlu0 %652
        %v654 = vsel %vm382, %v645, 0.0
        %655 = vadd.xlane.f32.xlu0 %v654
        %v656 = vpop.xlane.xlu0 %655
        %v657 = vsel %vm382, %v647, 0.0
        %658 = vadd.xlane.f32.xlu0 %v657
        %v659 = vpop.xlane.xlu0 %658
        %v660 = vrcp.pop %v650
        %v661 = vrcp.pop %v653
        %v662 = vrcp.pop %v656
        %v663 = vrcp.pop %v659
        %v664 = vmul.f32 %v641, %v660
        %v665 = vmul.f32 %v643, %v661
        %v666 = vmul.f32 %v645, %v662
        %v667 = vmul.f32 %v647, %v663
        %v668 = vpack.c.bf16 %v665, %v664
        %v669 = vpack.c.bf16 %v667, %v666
        %v671 = vsel %vm382, %v504, 0
        %v674 = vsel %vm382, %v505, 0
        %v677 = vsel %vm382, %v668, 0
        %v680 = vsel %vm382, %v669, 0
        %682 = vmatpush.bf16.xpose.msra.mxu0 0
        %683 = vmatpush.bf16.xpose.msra.mxu0 0
        %684 = vmatpush.bf16.xpose.msra.mxu0 0
        %685 = vmatpush.bf16.xpose.msra.mxu0 0
        %686 = vmatpush.bf16.xpose.msra.mxu0 0
        %687 = vmatpush.bf16.xpose.msra.mxu0 0
        %688 = vmatpush.bf16.xpose.msra.mxu0 %v680
        %689 = vmatpush.bf16.xpose.msra.mxu0 %v677
        %690 = vmatmul.bf16.gmra.mxu0 %v671
        %v691 = vpop.f32.mrf.mxu0
        %v692 = vadd.f32 0.0, %v691
        %v693 = vpop.f32.mrf.mxu0
        %v694 = vadd.f32 0.0, %v693
        %695 = vmatmul.bf16.gmra.mxu0 %v674
        %v696 = vpop.f32.mrf.mxu0
        %v697 = vadd.f32 0.0, %v696
        %v698 = vpop.f32.mrf.mxu0
        %v699 = vadd.f32 0.0, %v698
        %700 = vdwg.mxu0
        %v702 = vsel %vm382, %v581, 0
        %v705 = vsel %vm382, %v582, 0
        %707 = vmatpush.bf16.msra.mxu0 0
        %708 = vmatpush.bf16.msra.mxu0 0
        %709 = vmatpush.bf16.msra.mxu0 0
        %710 = vmatpush.bf16.msra.mxu0 0
        %711 = vmatpush.bf16.msra.mxu0 0
        %712 = vmatpush.bf16.msra.mxu0 0
        %713 = vmatpush.bf16.msra.mxu0 %v505
        %714 = vmatpush.bf16.msra.mxu0 %v504
        %715 = vmatmul.bf16.gmra.mxu0 %v702
        %v716 = vpop.f32.mrf.mxu0
        %v717 = vadd.f32 %v692, %v716
        %v718 = vpop.f32.mrf.mxu0
        %v719 = vadd.f32 %v694, %v718
        %720 = vmatmul.bf16.gmra.mxu0 %v705
        %v721 = vpop.f32.mrf.mxu0
        %v722 = vadd.f32 %v697, %v721
        %v723 = vpop.f32.mrf.mxu0
        %v724 = vadd.f32 %v699, %v723
        %725 = vdwg.mxu0
        %726 = vst.msk [vmem:[%s348] sm:$0xff] %vm382, %v717
        %727 = vst.msk [vmem:[%s348 + $0x8] sm:$0xff] %vm382, %v719
        %728 = vst.msk [vmem:[%s348 + $0x10] sm:$0xff] %vm382, %v722
        %729 = vst.msk [vmem:[%s348 + $0x18] sm:$0xff] %vm382, %v724
        %s730 = sand.u32 %s186, 1
        %s731 = scalar_lea.sflag [#allocation4], %s730
        %s732 = sand.u32 %s186, 1
        %s733 = smul.addr %s732, 32
        %s734 = scalar_lea.vmem [#allocation10], %s733
        // Predicated region
        $region65: #{tpu_custom_call.1} parent=47 // pred_check
          %p735 = pneg %p196
        $region66: #{tpu_custom_call.1} parent=47 // pred_check_branch
          %737 = sbr.rel (%p735) target = $region68
        $region67: #{tpu_custom_call.1} parent=47 // pred_region
          %739 = vsyncadd %s731, 0
          %s740 = smul.addr %s26, 4
          %s741 = smul.addr %s740, 8
          %s742 = scalar_lea.hbm %s7, %s741
          %s743 = sshll.u32 %s734, 4
          %s744 = int_to_ptr.vmem [resolvable:$true] %s743
          %s745 = sshll.u32 %s742, 4
          %s746 = int_to_ptr.hbm [resolvable:$true] %s745
          %751 = dma.vmem_to_hbm [thread:$0]  %s744, 512, %s746, %s731, 128, 128, 8
        $region68: #{tpu_custom_call.1} parent=47 // pred_fallthru
          _
      $region48: #{tpu_custom_call.1} parent=5 // pred_fallthru
        _
      %p752 = scmp.le.s32.totalorder 2, %s21
      // Predicated region
      $region69: #{tpu_custom_call.1} parent=5 // pred_check
        %p753 = pneg %p752
      $region70: #{tpu_custom_call.1} parent=5 // pred_check_branch
        %755 = sbr.rel (%p753) target = $region72
      $region71: #{tpu_custom_call.1} parent=5 // pred_region
        %s756 = ssub.s32 %s21, 2
        // Predicated region
        $region73: #{tpu_custom_call.1} parent=71 // pred_check
          %p757 = pneg %p202
        $region74: #{tpu_custom_call.1} parent=71 // pred_check_branch
          %759 = sbr.rel (%p757) target = $region76
        $region75: #{tpu_custom_call.1} parent=71 // pred_region
          %s760 = sand.u32 %s187, 1
          %s761 = scalar_lea.sflag [#allocation4], %s760
          %s762 = sand.u32 %s187, 1
          %s763 = smul.addr %s762, 32
          %s764 = scalar_lea.vmem [#allocation10], %s763
          %766 = dma.done %s761, 512
        $region76: #{tpu_custom_call.1} parent=71 // pred_fallthru
          _
      $region72: #{tpu_custom_call.1} parent=5 // pred_fallthru
        _
    $region6: #{tpu_custom_call.1} parent=1 // loop_footer
      %s25 = sadd.s32 1, %s21
    $region7: #{tpu_custom_call.1} parent=1 // loop_footer_branch
      %20 = sbr.rel target = $region3
    $region8: #{tpu_custom_call.1} parent=1 // loop_exit
      _
    %767 = vsyncpa [#allocation3], 1
    %s768 = scalar_lea.sflag [#allocation3], 1
    %769 = vsyncpa %s768, 1
    %770 = vsyncpa [#allocation6], 1
    %771 = vsyncpa [#allocation9], 1
    %772 = vsyncpa [#allocation4], 1
    %s773 = scalar_lea.sflag [#allocation4], 1
    %774 = vsyncpa %s773, 1

</llo_original>
